<compile_context>
chip_gen: v5e
topology: v5e:2x2
jax: 0.10.0
libtpu: 0.0.40
codegen_flags: <defaults>
</compile_context>

<pallas_src>
import jax
import jax.numpy as jnp
from jax.experimental import pallas as pl
from jax.experimental.pallas import tpu as pltpu


def _attention_kernel(x_ref, w_ref, b_ref, o_ref):
    # x_ref: (TB, S, D) native dtype; w_ref: (D, 1) x.dtype; b_ref: (1,) f32 SMEM.
    tb, S, D = x_ref.shape
    x = x_ref[...]                       # (TB, S, D), stays in the input dtype
    w = w_ref[...]                       # (D, 1)
    b = b_ref[0]                         # scalar bias from SMEM

    # Linear(D, 1) on the MXU with f32 accumulation.  (TB,S,D)->(TB*S,D) is a
    # layout-free reshape when S % 8 == 0; no f32 copy of the tile is made.
    xs = x.reshape(tb * S, D)
    scores = jnp.dot(xs, w, preferred_element_type=jnp.float32)   # (TB*S, 1)
    scores = jnp.tanh(scores.reshape(tb, S, 1) + b)               # (TB, S, 1)

    # Softmax over the sequence axis (axis=-2).  Keeping scores (TB, S, 1)
    # avoids a sublane<->lane round trip when broadcasting attn over D below.
    m = jnp.max(scores, axis=-2, keepdims=True)                   # (TB, 1, 1)
    e = jnp.exp(scores - m)                                       # (TB, S, 1)
    denom = jnp.sum(e, axis=-2, keepdims=True)                    # (TB, 1, 1)
    attn = e * pl.reciprocal(denom, approx=True)                  # (TB, S, 1)

    # weighted_inputs = inputs * attention, multiplied in the input dtype so the
    # (TB, S, D) tile is never promoted to f32 (matches PyTorch low-precision
    # behaviour; exact for f32 inputs).
    o_ref[...] = (x * attn.astype(x.dtype)).astype(o_ref.dtype)


_PER_TC_VMEM_BYTES = 64 * 1024 * 1024   # v7x per-TensorCore VMEM (smallest gen)


def _physical_vmem_bytes():
    try:
        return int(pltpu.get_tpu_info().vmem_capacity_bytes)
    except Exception:
        return _PER_TC_VMEM_BYTES


def _choose_block_batch(B, S, D, itemsize, target_tile_bytes, min_steps):
    """Largest divisor of B whose (tb, S, D) tile stays within target_tile_bytes
    while keeping at least `min_steps` grid steps (pipeline overlap + megacore)."""
    row_bytes = S * D * itemsize
    cap_bytes = max(1, target_tile_bytes // row_bytes)
    cap_steps = max(1, B // max(1, min_steps))
    tb_max = max(1, min(B, cap_bytes, cap_steps))
    tb = 1
    for cand in range(1, tb_max + 1):        # largest divisor of B <= tb_max
        if B % cand == 0:
            tb = cand
    return tb


def attention_mechanism(inputs, weight, bias):
    """Pallas implementation of AttentionMechanism.forward.

    Args:
      inputs: (B, S, D) array.
      weight: (1, D) array (nn.Linear(input_dim, 1).weight, PyTorch layout).
      bias:   (1,)   array (nn.Linear bias).
    Returns:
      (B, S, D) weighted inputs, same dtype as `inputs`.
    """
    B, S, D = inputs.shape
    # MXU takes both operands in the activation dtype; accumulation is f32.
    weight = jnp.asarray(weight).reshape(D, 1).astype(inputs.dtype)   # (D, 1)
    bias = jnp.asarray(bias, jnp.float32).reshape(1,)

    itemsize = inputs.dtype.itemsize
    # Per-TensorCore VMEM budget (get_tpu_info may report per-chip on v7x; clamp).
    vmem_budget = min(_physical_vmem_bytes(), _PER_TC_VMEM_BYTES)

    # ~4 MiB tiles and >= min(B, 8) grid steps: enough steps for the automatic
    # double-buffer pipeline on every chip and >= 4 steps per TC on v7x megacore.
    tb = _choose_block_batch(B, S, D, itemsize,
                             target_tile_bytes=4 * 1024 * 1024,
                             min_steps=min(B, 8))
    grid = (B // tb,)

    # Per-step block VMEM: double-buffered input + double-buffered output.
    block_bytes = 4 * tb * S * D * itemsize
    if block_bytes > vmem_budget // 2:
        # TODO(synk): tile S with a two-pass / online softmax when a single
        # (1, S, D) row does not fit in the VMEM budget.
        raise ValueError(
            f"(tb={tb}, S={S}, D={D}) block needs {block_bytes} B of VMEM "
            f"(budget {vmem_budget // 2} B); sequence tiling not implemented.")

    cost = pl.CostEstimate(
        flops=3 * B * S * D,
        transcendentals=2 * B * S,
        bytes_accessed=2 * B * S * D * itemsize + D * weight.dtype.itemsize + 4,
    )

    # TODO(synk): when D % 128 != 0 (e.g. D=32) the vreg->VMEM stores are masked
    # (vst.msk).  A lane-dense flattened (tb, S*D) output slab would fix the
    # store path but forces an in-kernel relayout for the Linear(D,1) structure,
    # so the natural (tb, S, D) layout is kept.
    return pl.pallas_call(
        _attention_kernel,
        out_shape=jax.ShapeDtypeStruct((B, S, D), inputs.dtype),
        grid_spec=pltpu.PrefetchScalarGridSpec(
            num_scalar_prefetch=0,
            grid=grid,
            in_specs=[
                pl.BlockSpec((tb, S, D), lambda i: (i, 0, 0)),
                pl.BlockSpec((D, 1), lambda i: (0, 0)),
                pl.BlockSpec(memory_space=pltpu.SMEM),   # bias: scalar path
            ],
            out_specs=pl.BlockSpec((tb, S, D), lambda i: (i, 0, 0)),
        ),
        compiler_params=pltpu.CompilerParams(
            dimension_semantics=("parallel",),
            vmem_limit_bytes=int(vmem_budget * 3 // 4),
        ),
        cost_estimate=cost,
    )(inputs, weight, bias)


def _reference(inputs, weight, bias):
    # Pure-JAX reference mirroring the PyTorch forward (weight in (1, D) layout).
    scores = jnp.tanh(jnp.einsum("bsd,od->bso", inputs, weight) + bias)   # (B,S,1)
    attn = jax.nn.softmax(jnp.squeeze(scores, -1), axis=-1)[..., None]    # (B,S,1)
    return inputs * attn


if __name__ == "__main__":
    B, S, D = 2, 8, 32

    key = jax.random.PRNGKey(0)
    k_x, k_w, k_b = jax.random.split(key, 3)

    x = jax.random.normal(k_x, (B, S, D), dtype=jnp.float32)
    # Deterministic init of nn.Linear(input_dim, 1) parameters (PyTorch layout).
    weight = jax.random.normal(k_w, (1, D), dtype=jnp.float32) * (1.0 / jnp.sqrt(D))
    bias = jax.random.normal(k_b, (1,), dtype=jnp.float32) * 0.01

    out = jax.block_until_ready(attention_mechanism(x, weight, bias))

    ref = _reference(x, weight, bias)
    assert out.shape == (B, S, D)
    # Tolerance covers the approximate (EUP) reciprocal in the softmax denom.
    assert jnp.allclose(out, ref, atol=2e-3, rtol=2e-3), "mismatch vs reference"

    print("KERNEL_OK")
</pallas_src>

<mosaic_0001>
module attributes {stable_mosaic.version = 11 : i64} {
  func.func @_attention_kernel(%arg0: i32, %arg1: memref<1x8x32xf32, #tpu.memory_space<vmem>>, %arg2: memref<32x1xf32, #tpu.memory_space<vmem>>, %arg3: memref<1xf32, #tpu.memory_space<smem>>, %arg4: memref<1x8x32xf32, #tpu.memory_space<vmem>>) attributes {dimension_semantics = [#tpu.dimension_semantics<parallel>], iteration_bounds = array<i64: 2>, scalar_prefetch = 0 : i64, scratch_operands = 0 : i64, tpu.core_type = #tpu.core_type<tc>, window_params = [{transform_indices = @transform_0, window_bounds = array<i64: 1, 8, 32>}, {pipeline_mode = #tpu.pipeline_mode<synchronous>, transform_indices = @transform_1, window_bounds = array<i64: 32, 1>}, {transform_indices = @transform_2, window_bounds = array<i64: 1>}, {transform_indices = @transform_3, window_bounds = array<i64: 1, 8, 32>}]} {
    %c0 = arith.constant 0 : index
    %c0_0 = arith.constant 0 : index
    %c0_1 = arith.constant 0 : index
    %0 = vector.load %arg1[%c0, %c0_0, %c0_1] : memref<1x8x32xf32, #tpu.memory_space<vmem>>, vector<1x8x32xf32>
    %c0_2 = arith.constant 0 : index
    %c0_3 = arith.constant 0 : index
    %1 = vector.load %arg2[%c0_2, %c0_3] : memref<32x1xf32, #tpu.memory_space<vmem>>, vector<32x1xf32>
    %c0_4 = arith.constant 0 : index
    %2 = memref.load %arg3[%c0_4] : memref<1xf32, #tpu.memory_space<smem>>
    %3 = vector.shape_cast %0 : vector<1x8x32xf32> to vector<8x32xf32>
    %cst = arith.constant dense<0.000000e+00> : vector<8x1xf32>
    %4 = tpu.matmul %3, %1, %cst {dimension_numbers = #tpu.dot_dimension_numbers<[1], [0], [0], [1], [0, 0, 1, 1], [], []>} : vector<8x32xf32>, vector<32x1xf32>, vector<8x1xf32> -> vector<8x1xf32>
    %5 = vector.shape_cast %4 : vector<8x1xf32> to vector<1x8x1xf32>
    %6 = vector.broadcast %2 : f32 to vector<1x8x1xf32>
    %7 = arith.addf %5, %6 : vector<1x8x1xf32>
    %8 = math.tanh %7 : vector<1x8x1xf32>
    %cst_5 = arith.constant dense<0xFF800000> : vector<1x1xf32>
    %9 = vector.multi_reduction <maximumf>, %8, %cst_5 [1] : vector<1x8x1xf32> to vector<1x1xf32>
    %10 = vector.shape_cast %9 : vector<1x1xf32> to vector<1x1x1xf32>
    %11 = vector.broadcast %10 : vector<1x1x1xf32> to vector<1x8x1xf32>
    %12 = arith.subf %8, %11 : vector<1x8x1xf32>
    %13 = math.exp %12 : vector<1x8x1xf32>
    %cst_6 = arith.constant dense<0.000000e+00> : vector<1x1xf32>
    %14 = vector.multi_reduction <add>, %13, %cst_6 [1] : vector<1x8x1xf32> to vector<1x1xf32>
    %15 = vector.shape_cast %14 : vector<1x1xf32> to vector<1x1x1xf32>
    %16 = tpu.reciprocal %15 {approx = true} : vector<1x1x1xf32> -> vector<1x1x1xf32>
    %17 = vector.broadcast %16 : vector<1x1x1xf32> to vector<1x8x1xf32>
    %18 = arith.mulf %13, %17 : vector<1x8x1xf32>
    %19 = vector.broadcast %18 : vector<1x8x1xf32> to vector<1x8x32xf32>
    %20 = arith.mulf %0, %19 : vector<1x8x32xf32>
    %c0_7 = arith.constant 0 : index
    %c0_8 = arith.constant 0 : index
    %c0_9 = arith.constant 0 : index
    %21 = vector.load %arg4[%c0_7, %c0_8, %c0_9] : memref<1x8x32xf32, #tpu.memory_space<vmem>>, vector<1x8x32xf32>
    tpu.vector_store %arg4[%c0_7, %c0_8, %c0_9], %20 {strides = array<i32>} : memref<1x8x32xf32, #tpu.memory_space<vmem>>, vector<1x8x32xf32>,
    return
  }
  func.func @transform_0(%arg0: i32) -> (i32, i32, i32) {
    %c0_i32 = arith.constant 0 : i32
    %c0_i32_0 = arith.constant 0 : i32
    %c0_i32_1 = arith.constant 0 : i32
    return %arg0, %c0_i32, %c0_i32_0 : i32, i32, i32
  }
  func.func @transform_1(%arg0: i32) -> (i32, i32) {
    %c0_i32 = arith.constant 0 : i32
    %c0_i32_0 = arith.constant 0 : i32
    %c0_i32_1 = arith.constant 0 : i32
    return %c0_i32, %c0_i32_0 : i32, i32
  }
  func.func @transform_2(%arg0: i32) -> i32 {
    %c0_i32 = arith.constant 0 : i32
    %c0_i32_0 = arith.constant 0 : i32
    return %c0_i32 : i32
  }
  func.func @transform_3(%arg0: i32) -> (i32, i32, i32) {
    %c0_i32 = arith.constant 0 : i32
    %c0_i32_0 = arith.constant 0 : i32
    %c0_i32_1 = arith.constant 0 : i32
    return %arg0, %c0_i32, %c0_i32_0 : i32, i32, i32
  }
}

</mosaic_0001>

<llo_original>
// kernel: tpu_custom_call.1
$region0: #{tpu_custom_call.1}
  #allocation0 [shape = 'u32[]', space=smem, size = 0x4, offset = 0x4, fixed_abs, tag = 'smem constant byte address 0x4 - core index']
  #allocation1 [shape = 'u32[72,128]{1,0:T(1,128)}', space=vmem, size = 0x9000, scoped, tag = 'internal scratch']
  #allocation2 [shape = 'f32[1]{0:T(128)S(6)}', space=smem, size = 0x200, scoped, tag = 'scoped memory for tpu_custom_call.1']
  %s0 = inlined_call_operand.vmem [shape: f32[2,8,32], index: 0, kind: input, shape index: {}]
  %s1 = inlined_call_operand.vmem [shape: f32[32,1], index: 1, kind: input, shape index: {}]
  %s2 = inlined_call_operand.<no memory space> [shape: f32[1], index: 2, kind: input, shape index: {}]
  %s3 = inlined_call_operand.hbm [shape: f32[2,8,32], index: 3, kind: output, shape index: {}]
  %s4 = sld [smem:[#allocation0]]
  $region45: #{tpu_custom_call.1} parent=0
    _
  %s6 = ssub.s32 1, %s4
  %s7 = scalar_select 0, %s6, %s4
  %8 = sst [smem:[#allocation2]] %s2
  $region1: #{tpu_custom_call.1} parent=0
    #allocation3 [shape = 'u8[8192]{0}', space=vmem, size = 0x2000, scoped, tag = 'output window, operand 0']
    #allocation4 [shape = 's32[2]{0}', space=sflag, size = 0x8, scoped, tag = 'scoped memory for tpu_custom_call.1']
    %9 = vsyncpa [#allocation4], 0
    %s10 = scalar_lea.sflag [#allocation4], 1
    %11 = vsyncpa %s10, 0
    loop: start=0, step=1, limit=4
    $region2: #{tpu_custom_call.1} parent=1 // loop_pre_header
      _
    $region3: #{tpu_custom_call.1} parent=1 // loop_header
      %s13 = sphi 0, %s17
      %p14 = scmp.ge.s32.totalorder %s13, 4
      %s23 = sphi 0, %s25
      %s26 = sphi 0, %s23
      %s27 = sphi 0, %s26
      %s43 = sphi 0, %s27
      %s47 = sphi 0, %s47
      %s49 = sphi 0, %s47
      %s50 = sphi 0, %s49
      %s64 = sphi 0, %s50
      %s68 = sphi 0, %s68
      %s70 = sphi 0, %s68
      %s71 = sphi 0, %s70
      %s85 = sphi 0, %s71
      %s91 = sphi 0, %s93
      %s94 = sphi 0, %s91
      %s95 = sphi 0, %s94
      %s111 = sphi 0, %s95
    $region4: #{tpu_custom_call.1} parent=1 // loop_header_branch
      %16 = sbr.rel (%p14) target = $region8
    $region5: #{tpu_custom_call.1} parent=1 // loop_body
      %s18 = ssub.s32 %s13, 1
      %s19 = ssub.s32 %s13, 2
      %s20 = sadd.s32 %s13, 1
      %s21 = ssub.s32 %s13, %s20
      %p22 = scmp.eq.s32.totalorder %s21, 0
      %s24 = sadd.s32 %s23, 1
      %s25 = scalar_select %p22, %s23, %s24
      %p28 = pneg %p22
      %p29 = scmp.eq.s32.totalorder %s13, 1
      %p30 = por %p28, %p29
      %p31 = scmp.ne.s32.totalorder %s23, %s26
      %p32 = scmp.eq.s32.totalorder %s13, 0
      %p33 = por %p31, %p32
      %p34 = scmp.ne.s32.totalorder %s23, %s26
      %p35 = scmp.eq.s32.totalorder %s18, 1
      %p36 = por %p34, %p35
      %p37 = scmp.ne.s32.totalorder %s26, %s27
      %p38 = scmp.eq.s32.totalorder %s18, 0
      %p39 = por %p37, %p38
      %p40 = scmp.ne.s32.totalorder %s26, %s27
      %p41 = scmp.eq.s32.totalorder %s19, 1
      %p42 = por %p40, %p41
      %p44 = scmp.ne.s32.totalorder %s27, %s43
      %p45 = scmp.eq.s32.totalorder %s19, 0
      %p46 = por %p44, %p45
      %s48 = sadd.s32 %s47, 1
      %p51 = scmp.eq.s32.totalorder %s13, 1
      %p52 = scmp.ne.s32.totalorder %s47, %s49
      %p53 = scmp.eq.s32.totalorder %s13, 0
      %p54 = por %p52, %p53
      %p55 = scmp.ne.s32.totalorder %s47, %s49
      %p56 = scmp.eq.s32.totalorder %s18, 1
      %p57 = por %p55, %p56
      %p58 = scmp.ne.s32.totalorder %s49, %s50
      %p59 = scmp.eq.s32.totalorder %s18, 0
      %p60 = por %p58, %p59
      %p61 = scmp.ne.s32.totalorder %s49, %s50
      %p62 = scmp.eq.s32.totalorder %s19, 1
      %p63 = por %p61, %p62
      %p65 = scmp.ne.s32.totalorder %s50, %s64
      %p66 = scmp.eq.s32.totalorder %s19, 0
      %p67 = por %p65, %p66
      %s69 = sadd.s32 %s68, 1
      %p72 = scmp.eq.s32.totalorder %s13, 1
      %p73 = scmp.ne.s32.totalorder %s68, %s70
      %p74 = scmp.eq.s32.totalorder %s13, 0
      %p75 = por %p73, %p74
      %p76 = scmp.ne.s32.totalorder %s68, %s70
      %p77 = scmp.eq.s32.totalorder %s18, 1
      %p78 = por %p76, %p77
      %p79 = scmp.ne.s32.totalorder %s70, %s71
      %p80 = scmp.eq.s32.totalorder %s18, 0
      %p81 = por %p79, %p80
      %p82 = scmp.ne.s32.totalorder %s70, %s71
      %p83 = scmp.eq.s32.totalorder %s19, 1
      %p84 = por %p82, %p83
      %p86 = scmp.ne.s32.totalorder %s71, %s85
      %p87 = scmp.eq.s32.totalorder %s19, 0
      %p88 = por %p86, %p87
      %s89 = ssub.s32 %s13, %s20
      %p90 = scmp.eq.s32.totalorder %s89, 0
      %s92 = sadd.s32 %s91, 1
      %s93 = scalar_select %p90, %s91, %s92
      %p96 = pneg %p90
      %p97 = scmp.eq.s32.totalorder %s13, 1
      %p98 = por %p96, %p97
      %p99 = scmp.ne.s32.totalorder %s91, %s94
      %p100 = scmp.eq.s32.totalorder %s13, 0
      %p101 = por %p99, %p100
      %p102 = scmp.ne.s32.totalorder %s91, %s94
      %p103 = scmp.eq.s32.totalorder %s18, 1
      %p104 = por %p102, %p103
      %p105 = scmp.ne.s32.totalorder %s94, %s95
      %p106 = scmp.eq.s32.totalorder %s18, 0
      %p107 = por %p105, %p106
      %p108 = scmp.ne.s32.totalorder %s94, %s95
      %p109 = scmp.eq.s32.totalorder %s19, 1
      %p110 = por %p108, %p109
      %p112 = scmp.ne.s32.totalorder %s95, %s111
      %p113 = scmp.eq.s32.totalorder %s19, 0
      %p114 = por %p112, %p113
      %p115 = scmp.le.s32.totalorder 1, %s13
      %p116 = scmp.lt.s32.totalorder %s13, 3
      %p117 = pnand %p115, %p116
      %p118 = pneg %p117
      // Predicated region
      $region9: #{tpu_custom_call.1} parent=5 // pred_check
        _
      $region10: #{tpu_custom_call.1} parent=5 // pred_check_branch
        %120 = sbr.rel (%p117) target = $region12
      $region11: #{tpu_custom_call.1} parent=5 // pred_region
        %s121 = ssub.s32 %s13, 1
        // Predicated region
        $region13: #{tpu_custom_call.1} parent=11 // pred_check
          %p122 = pneg %p60
        $region14: #{tpu_custom_call.1} parent=11 // pred_check_branch
          %124 = sbr.rel (%p122) target = $region16
        $region15: #{tpu_custom_call.1} parent=11 // pred_region
          _
        $region16: #{tpu_custom_call.1} parent=11 // pred_fallthru
          _
        // Predicated region
        $region17: #{tpu_custom_call.1} parent=11 // pred_check
          %p125 = pneg %p81
        $region18: #{tpu_custom_call.1} parent=11 // pred_check_branch
          %127 = sbr.rel (%p125) target = $region20
        $region19: #{tpu_custom_call.1} parent=11 // pred_region
          _
        $region20: #{tpu_custom_call.1} parent=11 // pred_fallthru
          _
      $region12: #{tpu_custom_call.1} parent=5 // pred_fallthru
        _
      %p128 = scmp.lt.s32.totalorder %s13, 2
      // Predicated region
      $region21: #{tpu_custom_call.1} parent=5 // pred_check
        %p129 = pneg %p128
      $region22: #{tpu_custom_call.1} parent=5 // pred_check_branch
        %131 = sbr.rel (%p129) target = $region24
      $region23: #{tpu_custom_call.1} parent=5 // pred_region
        // Predicated region
        $region25: #{tpu_custom_call.1} parent=23 // pred_check
          %p132 = pneg %p33
        $region26: #{tpu_custom_call.1} parent=23 // pred_check_branch
          %134 = sbr.rel (%p132) target = $region28
        $region27: #{tpu_custom_call.1} parent=23 // pred_region
          %p135 = scmp.lt.s32.totalorder %s13, 1
          %s136 = scalar_select %p135, %s13, 1
          %s137 = smul.addr %s136, 8
          %s138 = scalar_lea.vmem %s0, %s137
        $region28: #{tpu_custom_call.1} parent=23 // pred_fallthru
          _
      $region24: #{tpu_custom_call.1} parent=5 // pred_fallthru
        _
      %p139 = scmp.le.s32.totalorder 1, %s13
      %p140 = scmp.lt.s32.totalorder %s13, 3
      %p141 = pnand %p139, %p140
      %p142 = pneg %p141
      // Predicated region
      $region29: #{tpu_custom_call.1} parent=5 // pred_check
        _
      $region30: #{tpu_custom_call.1} parent=5 // pred_check_branch
        %144 = sbr.rel (%p141) target = $region32
      $region31: #{tpu_custom_call.1} parent=5 // pred_region
        %s145 = ssub.s32 %s13, 1
        %p146 = scmp.lt.s32.totalorder %s18, 1
        %s147 = scalar_select %p146, %s18, 1
        %s148 = smul.addr %s147, 8
        %s149 = scalar_lea.vmem %s0, %s148
        %p150 = pneg %p39
        %p151 = pneg %p36
        %p152 = pneg %p60
        %p153 = pneg %p57
        %p154 = pneg %p81
        %p155 = pneg %p78
        %p156 = pneg %p107
        %p157 = pneg %p104
        %s158 = sand.u32 %s94, 1
        %s159 = scalar_lea.sflag [#allocation4], %s158
        %s160 = sand.u32 %s94, 1
        %s161 = smul.addr %s160, 8
        %s162 = scalar_lea.vmem [#allocation3], %s161
        %p163 = scmp.lt.s32.totalorder %s18, 1
        %s164 = scalar_select %p163, %s18, 1
        %s165 = smul.addr %s164, 8
        %s166 = scalar_lea.vmem %s0, %s165
        %v167 = vld [vmem:[%s166] sm:$0xff]
        %v168 = vld [vmem:[%s1] sm:$0xff]
        %v169 = vld [vmem:[%s1 + $0x8] sm:$0xff]
        %v170 = vld [vmem:[%s1 + $0x10] sm:$0xff]
        %v171 = vld [vmem:[%s1 + $0x18] sm:$0xff]
        %s172 = sld [smem:[#allocation2]]
        %vm173 = vcmask 261120
        %v175 = vsel %vm173, %v167, 0
        %177 = vmatpush.msra.mxu0 0.0
        %178 = vmatpush.msra.mxu0 0.0
        %179 = vmatpush.msra.mxu0 0.0
        %180 = vmatpush.msra.mxu0 0.0
        %181 = vmatpush.msra.mxu0 0.0
        %182 = vmatpush.msra.mxu0 0.0
        %183 = vmatpush.msra.mxu0 0.0
        %184 = vmatpush.msra.mxu0 0.0
        %185 = vmatpush.msra.mxu0 0.0
        %186 = vmatpush.msra.mxu0 0.0
        %187 = vmatpush.msra.mxu0 0.0
        %188 = vmatpush.msra.mxu0 0.0
        %189 = vmatpush.msra.mxu0 %v171
        %190 = vmatpush.msra.mxu0 %v170
        %191 = vmatpush.msra.mxu0 %v169
        %192 = vmatpush.msra.mxu0 %v168
        %193 = vmatmul.f32.gmra.mxu0 %v175
        %v194 = vpop.f32.mrf.mxu0
        %v195 = vadd.f32 0.0, %v194
        %196 = vdwg.mxu0
        %v197 = vstv %s172
        %v198 = vadd.f32 %v195, %v197
        %v199 = vtanh.pop %v198
        %vm200 = vcmask 7168
        %v201 = vsel %vm200, %v199, -inf
        %v202 = vrot.slane %v201, 4
        %v203 = vmax.f32 %v201, %v202
        %v204 = vrot.slane %v203, 2
        %v205 = vmax.f32 %v203, %v204
        %v206 = vrot.slane %v205, 1
        %v207 = vmax.f32 %v205, %v206
        %v208 = vsub.f32 %v199, %v207
        %v209 = vmul.f32 %v208, 1.442695
        %v210 = vpow.pop %v209
        %v211 = vsel %vm200, %v210, 0.0
        %v212 = vrot.slane %v211, 4
        %v213 = vadd.f32 %v211, %v212
        %v214 = vrot.slane %v213, 2
        %v215 = vadd.f32 %v213, %v214
        %v216 = vrot.slane %v215, 1
        %v217 = vadd.f32 %v215, %v216
        %v218 = vrcp.pop %v217
        %v219 = vmul.f32 %v210, %v218
        %221 = vset.pattern.permute.xlu0 0
        %222 = vperm.xlu0 %221, %v219
        %v223 = vpop.permute.xlu0 %222
        %v225 = vmul.f32 %v167, %v223
        %226 = vst.msk [vmem:[%s162] sm:$0xff] %vm173, %v225
        %s227 = sand.u32 %s94, 1
        %s228 = scalar_lea.sflag [#allocation4], %s227
        %s229 = sand.u32 %s94, 1
        %s230 = smul.addr %s229, 8
        %s231 = scalar_lea.vmem [#allocation3], %s230
        // Predicated region
        $region33: #{tpu_custom_call.1} parent=31 // pred_check
          %p232 = pneg %p104
        $region34: #{tpu_custom_call.1} parent=31 // pred_check_branch
          %234 = sbr.rel (%p232) target = $region36
        $region35: #{tpu_custom_call.1} parent=31 // pred_region
          %236 = vsyncadd %s228, 0
          %s237 = smul.addr %s18, 8
          %s238 = scalar_lea.hbm %s3, %s237
          %s240 = sshll.u32 %s231, 4
          %s241 = int_to_ptr.vmem [resolvable:$true] %s240
          %s242 = sshll.u32 %s238, 4
          %s243 = int_to_ptr.hbm [resolvable:$true] %s242
          %245 = dma.vmem_to_hbm [thread:$0]  %s241, 128, %s243, %s228
        $region36: #{tpu_custom_call.1} parent=31 // pred_fallthru
          _
      $region32: #{tpu_custom_call.1} parent=5 // pred_fallthru
        _
      %p246 = scmp.le.s32.totalorder 2, %s13
      // Predicated region
      $region37: #{tpu_custom_call.1} parent=5 // pred_check
        %p247 = pneg %p246
      $region38: #{tpu_custom_call.1} parent=5 // pred_check_branch
        %249 = sbr.rel (%p247) target = $region40
      $region39: #{tpu_custom_call.1} parent=5 // pred_region
        %s250 = ssub.s32 %s13, 2
        // Predicated region
        $region41: #{tpu_custom_call.1} parent=39 // pred_check
          %p251 = pneg %p110
        $region42: #{tpu_custom_call.1} parent=39 // pred_check_branch
          %253 = sbr.rel (%p251) target = $region44
        $region43: #{tpu_custom_call.1} parent=39 // pred_region
          %s254 = sand.u32 %s95, 1
          %s255 = scalar_lea.sflag [#allocation4], %s254
          %s256 = sand.u32 %s95, 1
          %s257 = smul.addr %s256, 8
          %s258 = scalar_lea.vmem [#allocation3], %s257
          %260 = dma.done %s255, 128
        $region44: #{tpu_custom_call.1} parent=39 // pred_fallthru
          _
      $region40: #{tpu_custom_call.1} parent=5 // pred_fallthru
        _
    $region6: #{tpu_custom_call.1} parent=1 // loop_footer
      %s17 = sadd.s32 1, %s13
    $region7: #{tpu_custom_call.1} parent=1 // loop_footer_branch
      %12 = sbr.rel target = $region3
    $region8: #{tpu_custom_call.1} parent=1 // loop_exit
      _
    %261 = vsyncpa [#allocation4], 1
    %s262 = scalar_lea.sflag [#allocation4], 1
    %263 = vsyncpa %s262, 1

</llo_original>
